<compile_context>
chip_gen: v7x
topology: tpu7x:2x2x1
jax: 0.10.0
libtpu: 0.0.40
codegen_flags: <defaults>
</compile_context>

<pallas_src>
import jax
import jax.numpy as jnp
from jax.experimental import pallas as pl
from jax.experimental.pallas import tpu as pltpu

LANE = 128
TILE_B_MAX = 4096            # max batch rows per grid step (v5e-safe VMEM footprint)
SMALL_BATCH_SINGLE_TILE = 1024  # below this, use a single minimally padded tile


def _round_up(x, m):
    return ((x + m - 1) // m) * m


def _choose_tile_b(batch):
    """Adaptive batch tile: minimal padding for small B, big amortizing tiles
    (but >= 2 grid steps, for v7x's two TensorCores) for large B."""
    if batch <= SMALL_BATCH_SINGLE_TILE:
        return _round_up(batch, 16)          # 16: bf16 sublane-pack friendly
    return min(TILE_B_MAX, _round_up(pl.cdiv(batch, 2), LANE))


def _critic_kernel(x_ref, w1_ref, b1_ref, w2_ref, b2_ref, w3_ref, b3_ref, o_ref):
    # Layer 1: bf16 (TB, obs) @ bf16 (obs, Hp) -> f32 acc; bias + ReLU in f32.
    h1 = jnp.dot(x_ref[...], w1_ref[...], preferred_element_type=jnp.float32)
    h1 = jnp.maximum(h1 + b1_ref[...], 0.0)
    # Layer 2: cast activation to bf16 for the MXU, accumulate in f32.
    h2 = jnp.dot(h1.astype(jnp.bfloat16), w2_ref[...],
                 preferred_element_type=jnp.float32)
    h2 = jnp.maximum(h2 + b2_ref[...], 0.0)
    # Layer 3 (transposed, f32): (8, Hp) contracted with (TB, Hp) on Hp -> (8, TB).
    # Row 0 of w3 holds the real weights (rows 1..7 are zero padding); the batch
    # lands on the LANE axis so the (1, TB) output store is lane-dense.
    v = jax.lax.dot_general(
        w3_ref[...], h2,
        dimension_numbers=(((1,), (1,)), ((), ())),
        preferred_element_type=jnp.float32)              # (8, TB)
    o_ref[...] = v[0:1, :] + b3_ref[0, 0]                # (1, TB)


def model_critic_forward(x, kernel_params, *, tile_b=None):
    """x: (B, obs_size) float32.  Returns (B, 1) float32 (PyTorch ModelCritic fwd)."""
    w1, b1, w2, b2, w3, b3 = kernel_params   # padded shapes (see pad_params)
    B, obs = x.shape
    Hp = w1.shape[1]

    if tile_b is None:
        tile_b = _choose_tile_b(B)
    num_tiles = pl.cdiv(B, tile_b)
    b_pad = num_tiles * tile_b
    if b_pad != B:   # pad the ragged last tile; padded rows are sliced off below
        x = jnp.pad(x, ((0, b_pad - B), (0, 0)))
    x = x.astype(jnp.bfloat16)   # MXU-native; halves the pipelined HBM read of x

    const = lambda i: (0, 0)     # weights/biases: same block every step -> resident
    flops = 2 * b_pad * (obs * Hp + Hp * Hp + Hp)
    bytes_accessed = (2 * b_pad * obs                       # bf16 x
                      + 2 * (w1.size + w2.size)             # bf16 weights
                      + 4 * (b1.size + b2.size + w3.size + b3.size)
                      + 4 * b_pad)                          # f32 output

    out = pl.pallas_call(
        _critic_kernel,
        out_shape=jax.ShapeDtypeStruct((1, b_pad), jnp.float32),
        grid=(num_tiles,),
        in_specs=[
            pl.BlockSpec((tile_b, obs), lambda i: (i, 0)),       # x tile, pipelined
            pl.BlockSpec(w1.shape, const),                       # (obs, Hp) bf16
            pl.BlockSpec(b1.shape, const),                       # (1, Hp)   f32
            pl.BlockSpec(w2.shape, const),                       # (Hp, Hp)  bf16
            pl.BlockSpec(b2.shape, const),                       # (1, Hp)   f32
            pl.BlockSpec(w3.shape, const),                       # (8, Hp)   f32
            pl.BlockSpec(memory_space=pltpu.MemorySpace.SMEM),   # b3 scalar
        ],
        out_specs=pl.BlockSpec((1, tile_b), lambda i: (0, i)),   # lane-dense
        compiler_params=pltpu.CompilerParams(
            dimension_semantics=("parallel",),
            vmem_limit_bytes=32 * 1024 * 1024),
        cost_estimate=pl.CostEstimate(
            flops=flops, transcendentals=0, bytes_accessed=bytes_accessed),
    )(x, w1, b1, w2, b2, w3, b3)

    return out.reshape(b_pad, 1)[:B]


def init_params(key, obs_size, hidden_size=64):
    """Logical (unpadded) f32 params mimicking PyTorch nn.Linear init U[-1/sqrt(fan_in), +]."""
    def linear(k, fan_in, fan_out):
        kw, kb = jax.random.split(k)
        bound = 1.0 / jnp.sqrt(jnp.float32(fan_in))
        w = jax.random.uniform(kw, (fan_in, fan_out), jnp.float32, -bound, bound)
        b = jax.random.uniform(kb, (1, fan_out), jnp.float32, -bound, bound)
        return w, b

    k1, k2, k3 = jax.random.split(key, 3)
    w1, b1 = linear(k1, obs_size, hidden_size)
    w2, b2 = linear(k2, hidden_size, hidden_size)
    w3, b3 = linear(k3, hidden_size, 1)
    return (w1, b1, w2, b2, w3, b3)


def pad_params(params, lane=LANE):
    """Zero-pad hidden dim to a multiple of 128 lanes; bf16 matmul weights;
    reshape w3 for the transposed layer-3 matmul.

    Zero padding is exact: padded hidden units compute relu(0 + 0) = 0 (also
    exactly 0 in bf16) and the zero rows/cols of w2/w3 ignore them, so the
    padded network computes the same function.
    """
    w1, b1, w2, b2, w3, b3 = params
    obs, h = w1.shape
    hp = _round_up(h, lane)

    w1p = jnp.pad(w1, ((0, 0), (0, hp - h))).astype(jnp.bfloat16)
    b1p = jnp.pad(b1, ((0, 0), (0, hp - h)))                       # f32
    w2p = jnp.pad(w2, ((0, hp - h), (0, hp - h))).astype(jnp.bfloat16)
    b2p = jnp.pad(b2, ((0, 0), (0, hp - h)))                       # f32
    # w3: (H, 1) -> row vector in row 0 of an (8, Hp) f32 tile (rows 1..7 zero).
    w3p = jnp.zeros((8, hp), jnp.float32).at[0, :h].set(w3[:, 0])
    b3p = b3.reshape(1, 1).astype(jnp.float32)
    return (w1p, b1p, w2p, b2p, w3p, b3p)


def reference_forward_f32(x, params):
    w1, b1, w2, b2, w3, b3 = params
    h1 = jnp.maximum(x @ w1 + b1, 0.0)
    h2 = jnp.maximum(h1 @ w2 + b2, 0.0)
    return h2 @ w3 + b3


def reference_forward_bf16(x, params):
    """Same numerics as the kernel: bf16 matmul inputs, f32 accumulation."""
    w1, b1, w2, b2, w3, b3 = params
    bf = jnp.bfloat16
    h1 = jnp.dot(x.astype(bf), w1.astype(bf), preferred_element_type=jnp.float32)
    h1 = jnp.maximum(h1 + b1, 0.0)
    h2 = jnp.dot(h1.astype(bf), w2.astype(bf), preferred_element_type=jnp.float32)
    h2 = jnp.maximum(h2 + b2, 0.0)
    return h2 @ w3 + b3


if __name__ == "__main__":
    key = jax.random.PRNGKey(0)
    k_x, k_x2, k_p = jax.random.split(key, 3)

    obs_size = 32
    hidden_size = 64
    logical_params = init_params(k_p, obs_size, hidden_size)
    kernel_params = pad_params(logical_params)

    # Case 1: small rollout-sized batch (single minimally-padded tile).
    batch = 8
    x = jax.random.normal(k_x, (batch, obs_size), dtype=jnp.float32)
    out = jax.block_until_ready(model_critic_forward(x, kernel_params))
    assert out.shape == (batch, 1), out.shape
    ref_bf = reference_forward_bf16(x, logical_params)
    ref_f32 = reference_forward_f32(x, logical_params)
    assert jnp.allclose(out, ref_bf, atol=1e-2, rtol=1e-2), "mismatch vs bf16 reference"
    assert jnp.allclose(out, ref_f32, atol=5e-2, rtol=5e-2), "mismatch vs f32 reference"

    # Case 2: larger batch exercising the multi-tile ("parallel") grid + batch padding.
    batch2 = 2500
    x2 = jax.random.normal(k_x2, (batch2, obs_size), dtype=jnp.float32)
    out2 = jax.block_until_ready(model_critic_forward(x2, kernel_params))
    assert out2.shape == (batch2, 1), out2.shape
    ref2_bf = reference_forward_bf16(x2, logical_params)
    ref2_f32 = reference_forward_f32(x2, logical_params)
    assert jnp.allclose(out2, ref2_bf, atol=1e-2, rtol=1e-2), "mismatch vs bf16 reference (large)"
    assert jnp.allclose(out2, ref2_f32, atol=5e-2, rtol=5e-2), "mismatch vs f32 reference (large)"

    print("KERNEL_OK")
</pallas_src>

<mosaic_0001>
module attributes {stable_mosaic.version = 11 : i64} {
  func.func @_critic_kernel(%arg0: i32, %arg1: memref<16x32xbf16, #tpu.memory_space<vmem>>, %arg2: memref<32x128xbf16, #tpu.memory_space<vmem>>, %arg3: memref<1x128xf32, #tpu.memory_space<vmem>>, %arg4: memref<128x128xbf16, #tpu.memory_space<vmem>>, %arg5: memref<1x128xf32, #tpu.memory_space<vmem>>, %arg6: memref<8x128xf32, #tpu.memory_space<vmem>>, %arg7: memref<1x1xf32, #tpu.memory_space<smem>>, %arg8: memref<1x16xf32, #tpu.memory_space<vmem>>) attributes {dimension_semantics = [#tpu.dimension_semantics<parallel>], iteration_bounds = array<i64: 1>, scalar_prefetch = 0 : i64, scratch_operands = 0 : i64, tpu.core_type = #tpu.core_type<tc>, window_params = [{transform_indices = @transform_0, window_bounds = array<i64: 16, 32>}, {pipeline_mode = #tpu.pipeline_mode<synchronous>, transform_indices = @transform_1, window_bounds = array<i64: 32, 128>}, {pipeline_mode = #tpu.pipeline_mode<synchronous>, transform_indices = @transform_2, window_bounds = array<i64: 1, 128>}, {pipeline_mode = #tpu.pipeline_mode<synchronous>, transform_indices = @transform_3, window_bounds = array<i64: 128, 128>}, {pipeline_mode = #tpu.pipeline_mode<synchronous>, transform_indices = @transform_4, window_bounds = array<i64: 1, 128>}, {pipeline_mode = #tpu.pipeline_mode<synchronous>, transform_indices = @transform_5, window_bounds = array<i64: 8, 128>}, {transform_indices = @transform_6, window_bounds = array<i64: 1, 1>}, {transform_indices = @transform_7, window_bounds = array<i64: 1, 16>}]} {
    %c0 = arith.constant 0 : index
    %c0_0 = arith.constant 0 : index
    %0 = vector.load %arg1[%c0, %c0_0] : memref<16x32xbf16, #tpu.memory_space<vmem>>, vector<16x32xbf16>
    %c0_1 = arith.constant 0 : index
    %c0_2 = arith.constant 0 : index
    %1 = vector.load %arg2[%c0_1, %c0_2] : memref<32x128xbf16, #tpu.memory_space<vmem>>, vector<32x128xbf16>
    %cst = arith.constant dense<0.000000e+00> : vector<16x128xf32>
    %2 = tpu.matmul %0, %1, %cst {dimension_numbers = #tpu.dot_dimension_numbers<[1], [0], [0], [1], [0, 0, 1, 1], [], []>} : vector<16x32xbf16>, vector<32x128xbf16>, vector<16x128xf32> -> vector<16x128xf32>
    %c0_3 = arith.constant 0 : index
    %c0_4 = arith.constant 0 : index
    %3 = vector.load %arg3[%c0_3, %c0_4] : memref<1x128xf32, #tpu.memory_space<vmem>>, vector<1x128xf32>
    %4 = vector.broadcast %3 : vector<1x128xf32> to vector<16x128xf32>
    %5 = arith.addf %2, %4 : vector<16x128xf32>
    %cst_5 = arith.constant 0.000000e+00 : f32
    %6 = vector.broadcast %cst_5 : f32 to vector<16x128xf32>
    %7 = arith.maximumf %5, %6 : vector<16x128xf32>
    %8 = arith.truncf %7 : vector<16x128xf32> to vector<16x128xbf16>
    %c0_6 = arith.constant 0 : index
    %c0_7 = arith.constant 0 : index
    %9 = vector.load %arg4[%c0_6, %c0_7] : memref<128x128xbf16, #tpu.memory_space<vmem>>, vector<128x128xbf16>
    %cst_8 = arith.constant dense<0.000000e+00> : vector<16x128xf32>
    %10 = tpu.matmul %8, %9, %cst_8 {dimension_numbers = #tpu.dot_dimension_numbers<[1], [0], [0], [1], [0, 0, 1, 1], [], []>} : vector<16x128xbf16>, vector<128x128xbf16>, vector<16x128xf32> -> vector<16x128xf32>
    %c0_9 = arith.constant 0 : index
    %c0_10 = arith.constant 0 : index
    %11 = vector.load %arg5[%c0_9, %c0_10] : memref<1x128xf32, #tpu.memory_space<vmem>>, vector<1x128xf32>
    %12 = vector.broadcast %11 : vector<1x128xf32> to vector<16x128xf32>
    %13 = arith.addf %10, %12 : vector<16x128xf32>
    %cst_11 = arith.constant 0.000000e+00 : f32
    %14 = vector.broadcast %cst_11 : f32 to vector<16x128xf32>
    %15 = arith.maximumf %13, %14 : vector<16x128xf32>
    %c0_12 = arith.constant 0 : index
    %c0_13 = arith.constant 0 : index
    %16 = vector.load %arg6[%c0_12, %c0_13] : memref<8x128xf32, #tpu.memory_space<vmem>>, vector<8x128xf32>
    %cst_14 = arith.constant dense<0.000000e+00> : vector<8x16xf32>
    %17 = tpu.matmul %16, %15, %cst_14 {dimension_numbers = #tpu.dot_dimension_numbers<[1], [1], [0], [0], [0, 0, 1, 0], [], []>} : vector<8x128xf32>, vector<16x128xf32>, vector<8x16xf32> -> vector<8x16xf32>
    %18 = vector.extract_strided_slice %17 {offsets = [0, 0], sizes = [1, 16], strides = [1, 1]} : vector<8x16xf32> to vector<1x16xf32>
    %c0_15 = arith.constant 0 : index
    %c0_16 = arith.constant 0 : index
    %19 = memref.load %arg7[%c0_15, %c0_16] : memref<1x1xf32, #tpu.memory_space<smem>>
    %20 = vector.broadcast %19 : f32 to vector<1x16xf32>
    %21 = arith.addf %18, %20 : vector<1x16xf32>
    %c0_17 = arith.constant 0 : index
    %c0_18 = arith.constant 0 : index
    %22 = vector.load %arg8[%c0_17, %c0_18] : memref<1x16xf32, #tpu.memory_space<vmem>>, vector<1x16xf32>
    tpu.vector_store %arg8[%c0_17, %c0_18], %21 {strides = array<i32>} : memref<1x16xf32, #tpu.memory_space<vmem>>, vector<1x16xf32>,
    return
  }
  func.func @transform_0(%arg0: i32) -> (i32, i32) {
    %c0_i32 = arith.constant 0 : i32
    %c0_i32_0 = arith.constant 0 : i32
    return %arg0, %c0_i32 : i32, i32
  }
  func.func @transform_1(%arg0: i32) -> (i32, i32) {
    %c0_i32 = arith.constant 0 : i32
    %c0_i32_0 = arith.constant 0 : i32
    %c0_i32_1 = arith.constant 0 : i32
    return %c0_i32, %c0_i32_0 : i32, i32
  }
  func.func @transform_2(%arg0: i32) -> (i32, i32) {
    %c0_i32 = arith.constant 0 : i32
    %c0_i32_0 = arith.constant 0 : i32
    %c0_i32_1 = arith.constant 0 : i32
    return %c0_i32, %c0_i32_0 : i32, i32
  }
  func.func @transform_3(%arg0: i32) -> (i32, i32) {
    %c0_i32 = arith.constant 0 : i32
    %c0_i32_0 = arith.constant 0 : i32
    %c0_i32_1 = arith.constant 0 : i32
    return %c0_i32, %c0_i32_0 : i32, i32
  }
  func.func @transform_4(%arg0: i32) -> (i32, i32) {
    %c0_i32 = arith.constant 0 : i32
    %c0_i32_0 = arith.constant 0 : i32
    %c0_i32_1 = arith.constant 0 : i32
    return %c0_i32, %c0_i32_0 : i32, i32
  }
  func.func @transform_5(%arg0: i32) -> (i32, i32) {
    %c0_i32 = arith.constant 0 : i32
    %c0_i32_0 = arith.constant 0 : i32
    %c0_i32_1 = arith.constant 0 : i32
    return %c0_i32, %c0_i32_0 : i32, i32
  }
  func.func @transform_6(%arg0: i32) -> (i32, i32) {
    %c0_i32 = arith.constant 0 : i32
    %c0_i32_0 = arith.constant 0 : i32
    %c0_i32_1 = arith.constant 0 : i32
    return %c0_i32, %c0_i32_0 : i32, i32
  }
  func.func @transform_7(%arg0: i32) -> (i32, i32) {
    %c0_i32 = arith.constant 0 : i32
    %c0_i32_0 = arith.constant 0 : i32
    return %c0_i32, %arg0 : i32, i32
  }
}

</mosaic_0001>

<llo_original>
// kernel: tpu_custom_call.1
$region0: #{tpu_custom_call.1}
  #allocation0 [shape = 'u32[]', space=smem, size = 0x4, offset = 0x4, fixed_abs, tag = 'smem constant byte address 0x4 - core index']
  #allocation1 [shape = 'u32[144,128]{1,0:T(1,128)}', space=vmem, size = 0x12000, scoped, tag = 'internal scratch']
  #allocation2 [shape = 'f32[1,1]{1,0:T(1,128)S(6)}', space=smem, size = 0x200, scoped, tag = 'scoped memory for tpu_custom_call.1']
  %s0 = inlined_call_operand.hbm [shape: bf16[16,32], index: 0, kind: input, shape index: {}]
  %s1 = inlined_call_operand.hbm [shape: bf16[32,128], index: 1, kind: input, shape index: {}]
  %s2 = inlined_call_operand.vmem [shape: f32[1,128], index: 2, kind: input, shape index: {}]
  %s3 = inlined_call_operand.hbm [shape: bf16[128,128], index: 3, kind: input, shape index: {}]
  %s4 = inlined_call_operand.vmem [shape: f32[1,128], index: 4, kind: input, shape index: {}]
  %s5 = inlined_call_operand.vmem [shape: f32[8,128], index: 5, kind: input, shape index: {}]
  %s6 = inlined_call_operand.<no memory space> [shape: f32[1,1], index: 6, kind: input, shape index: {}]
  %s7 = inlined_call_operand.hbm [shape: f32[1,16], index: 7, kind: output, shape index: {}]
  %s8 = sld [smem:[#allocation0]]
  $region50: #{tpu_custom_call.1} parent=0
    _
  %s10 = ssub.s32 1, %s8
  %s11 = scalar_select 0, %s10, %s8
  %12 = sst [smem:[#allocation2]] %s6
  $region1: #{tpu_custom_call.1} parent=0
    #allocation3 [shape = 'u8[4096]{0}', space=vmem, size = 0x1000, scoped, tag = 'input window, operand 0, single buffered']
    #allocation4 [shape = 's32[1]{0}', space=sflag, size = 0x4, scoped, tag = 'scoped memory for tpu_custom_call.1']
    #allocation5 [shape = 's32[1]{0}', space=sflag, size = 0x4, scoped, tag = 'scoped memory for tpu_custom_call.1']
    #allocation6 [shape = 'u8[8192]{0}', space=vmem, size = 0x2000, scoped, tag = 'input window, operand 1, single buffered']
    #allocation7 [shape = 's32[1]{0}', space=sflag, size = 0x4, scoped, tag = 'scoped memory for tpu_custom_call.1']
    #allocation8 [shape = 'u8[32768]{0}', space=vmem, size = 0x8000, scoped, tag = 'input window, operand 3, single buffered']
    #allocation9 [shape = 'u8[512]{0}', space=vmem, size = 0x400, scoped, tag = 'output window, operand 0, single buffered']
    %13 = vsyncpa [#allocation4], 0
    %14 = vsyncpa [#allocation7], 0
    %15 = vsyncpa [#allocation5], 0
    // Predicated region
    $region2: #{tpu_custom_call.1} parent=1 // pred_check
      _
    $region3: #{tpu_custom_call.1} parent=1 // pred_check_branch
      %17 = sbr.rel (0) target = $region5
    $region4: #{tpu_custom_call.1} parent=1 // pred_region
      %s19 = ssub.s32 128, 128
      %20 = vsyncadd [#allocation4], %s19
      %s21 = sshll.u32 [#allocation3], 4
      %s22 = int_to_ptr.vmem [resolvable:$true] %s21
      %27 = dma.hbm_to_vmem [thread:$0]  %s0, 128, %s22, [#allocation4], 64, 64, 4
    $region5: #{tpu_custom_call.1} parent=1 // pred_fallthru
      _
    // Predicated region
    $region6: #{tpu_custom_call.1} parent=1 // pred_check
      _
    $region7: #{tpu_custom_call.1} parent=1 // pred_check_branch
      %29 = sbr.rel (0) target = $region9
    $region8: #{tpu_custom_call.1} parent=1 // pred_region
      %s31 = ssub.s32 256, 256
      %32 = vsyncadd [#allocation7], %s31
      %s33 = sshll.u32 [#allocation6], 4
      %s34 = int_to_ptr.vmem [resolvable:$true] %s33
      %39 = dma.hbm_to_vmem [thread:$0]  %s1, 256, %s34, [#allocation7], 64, 64, 4
    $region9: #{tpu_custom_call.1} parent=1 // pred_fallthru
      _
    // Predicated region
    $region10: #{tpu_custom_call.1} parent=1 // pred_check
      _
    $region11: #{tpu_custom_call.1} parent=1 // pred_check_branch
      %41 = sbr.rel (0) target = $region13
    $region12: #{tpu_custom_call.1} parent=1 // pred_region
      _
    $region13: #{tpu_custom_call.1} parent=1 // pred_fallthru
      _
    // Predicated region
    $region14: #{tpu_custom_call.1} parent=1 // pred_check
      _
    $region15: #{tpu_custom_call.1} parent=1 // pred_check_branch
      %43 = sbr.rel (0) target = $region17
    $region16: #{tpu_custom_call.1} parent=1 // pred_region
      %s45 = ssub.s32 1024, 1024
      %46 = vsyncadd [#allocation7], %s45
      %s47 = sshll.u32 [#allocation8], 4
      %s48 = int_to_ptr.vmem [resolvable:$true] %s47
      %53 = dma.hbm_to_vmem [thread:$0]  %s3, 1024, %s48, [#allocation7], 64, 64, 4
    $region17: #{tpu_custom_call.1} parent=1 // pred_fallthru
      _
    // Predicated region
    $region18: #{tpu_custom_call.1} parent=1 // pred_check
      _
    $region19: #{tpu_custom_call.1} parent=1 // pred_check_branch
      %55 = sbr.rel (0) target = $region21
    $region20: #{tpu_custom_call.1} parent=1 // pred_region
      _
    $region21: #{tpu_custom_call.1} parent=1 // pred_fallthru
      _
    // Predicated region
    $region22: #{tpu_custom_call.1} parent=1 // pred_check
      _
    $region23: #{tpu_custom_call.1} parent=1 // pred_check_branch
      %57 = sbr.rel (0) target = $region25
    $region24: #{tpu_custom_call.1} parent=1 // pred_region
      _
    $region25: #{tpu_custom_call.1} parent=1 // pred_fallthru
      _
    // Predicated region
    $region26: #{tpu_custom_call.1} parent=1 // pred_check
      _
    $region27: #{tpu_custom_call.1} parent=1 // pred_check_branch
      %59 = sbr.rel (0) target = $region29
    $region28: #{tpu_custom_call.1} parent=1 // pred_region
      _
    $region29: #{tpu_custom_call.1} parent=1 // pred_fallthru
      _
    // Predicated region
    $region30: #{tpu_custom_call.1} parent=1 // pred_check
      _
    $region31: #{tpu_custom_call.1} parent=1 // pred_check_branch
      %61 = sbr.rel (0) target = $region33
    $region32: #{tpu_custom_call.1} parent=1 // pred_region
      %62 = dma.done [#allocation4], 128
    $region33: #{tpu_custom_call.1} parent=1 // pred_fallthru
      _
    // Predicated region
    $region34: #{tpu_custom_call.1} parent=1 // pred_check
      _
    $region35: #{tpu_custom_call.1} parent=1 // pred_check_branch
      %64 = sbr.rel (0) target = $region37
    $region36: #{tpu_custom_call.1} parent=1 // pred_region
      %65 = dma.done [#allocation7], 256
    $region37: #{tpu_custom_call.1} parent=1 // pred_fallthru
      _
    // Predicated region
    $region38: #{tpu_custom_call.1} parent=1 // pred_check
      _
    $region39: #{tpu_custom_call.1} parent=1 // pred_check_branch
      %67 = sbr.rel (0) target = $region41
    $region40: #{tpu_custom_call.1} parent=1 // pred_region
      %68 = dma.done [#allocation7], 1024
    $region41: #{tpu_custom_call.1} parent=1 // pred_fallthru
      _
    %v70 = vld [vmem:[#allocation3] sm:$0xf]
    %v71 = vld [vmem:[#allocation3 + $0x4] sm:$0xf]
    %v72 = vld [vmem:[#allocation6] sm:$0xf]
    %v73 = vld [vmem:[#allocation6 + $0x4] sm:$0xf]
    %v74 = vld [vmem:[#allocation6 + $0x8] sm:$0xf]
    %v75 = vld [vmem:[#allocation6 + $0xc] sm:$0xf]
    %v76 = vld [vmem:[%s2] sm:$0x1]
    %v78 = vlaneseq
    %v79 = vshrl.u32 %v78, 7
    %v80 = vsub.s32 0, %v79
    %v81 = vrot.slane %v76, %v80
    %v85 = vunpack.c.l.b16 %v70
    %v86 = vunpack.c.l.b16 %v71
    %v87 = vpack.c.b16 %v86, %v85
    %v92 = vunpack.c.l.b16 %v72
    %v93 = vunpack.c.l.b16 %v73
    %v94 = vunpack.c.l.b16 %v74
    %v95 = vunpack.c.l.b16 %v75
    %v96 = vpack.c.b16 %v93, %v92
    %v97 = vpack.c.b16 %v95, %v94
    %vm100 = vcmask 261120
    %v102 = vsel %vm100, %v87, 0
    %104 = vmatprep.subr.bf16.mxu0 0
    %105 = vmatpush1.bf16.msra.mxu0 %v96
    %106 = vmatprep.subr.bf16.mxu0 0
    %107 = vmatpush1.bf16.msra.mxu0 %v97
    %108 = vmatprep.subr.bf16.mxu0 0
    %109 = vmatpush1.bf16.msra.mxu0 0
    %110 = vmatprep.subr.bf16.mxu0 0
    %111 = vmatpush1.bf16.msra.mxu0 0
    %112 = vmatprep.subr.bf16.mxu0 0
    %113 = vmatpush1.bf16.msra.mxu0 0
    %114 = vmatprep.subr.bf16.mxu0 0
    %115 = vmatpush1.bf16.msra.mxu0 0
    %116 = vmatprep.subr.bf16.mxu0 0
    %117 = vmatpush1.bf16.msra.mxu0 0
    %118 = vmatprep.subr.bf16.mxu0 0
    %119 = vmatpush1.bf16.msra.mxu0 0
    %120 = vmatprep.subr.bf16.mxu0 0
    %121 = vmatpush1.bf16.msra.mxu0 0
    %122 = vmatprep.subr.bf16.mxu0 0
    %123 = vmatpush1.bf16.msra.mxu0 0
    %124 = vmatprep.subr.bf16.mxu0 0
    %125 = vmatpush1.bf16.msra.mxu0 0
    %126 = vmatprep.subr.bf16.mxu0 0
    %127 = vmatpush1.bf16.msra.mxu0 0
    %128 = vmatprep.subr.bf16.mxu0 0
    %129 = vmatpush1.bf16.msra.mxu0 0
    %130 = vmatprep.subr.bf16.mxu0 0
    %131 = vmatpush1.bf16.msra.mxu0 0
    %132 = vmatprep.subr.bf16.mxu0 0
    %133 = vmatpush1.bf16.msra.mxu0 0
    %134 = vmatprep.subr.bf16.mxu0 0
    %135 = vmatpush1.bf16.msra.mxu0 0
    %136 = vmatprep.mubr.bf16.mxu0 0
    %137 = vmatmul.mubr.bf16.gmra.mrb[0].mxu0 %v102
    %v138 = vpop.f32.mrb[0].mxu0
    %v139 = vadd.f32 %v81, %v138
    %v140 = vpop.f32.mrb[0].mxu0
    %v141 = vpop.f32.mrb[0].mxu0
    %v142 = vadd.f32 %v81, %v141
    %v143 = vpop.f32.mrb[0].mxu0
    %144 = vdwg.mxu0
    %v145 = vmax.f32 %v139, 0.0
    %v146 = vmax.f32 %v142, 0.0
    %v147 = vpack.c.bf16 %v146, %v145
    %v148 = vld [vmem:[#allocation8] sm:$0xf]
    %v149 = vld [vmem:[#allocation8 + $0x4] sm:$0xf]
    %v150 = vld [vmem:[#allocation8 + $0x8] sm:$0xf]
    %v151 = vld [vmem:[#allocation8 + $0xc] sm:$0xf]
    %v152 = vld [vmem:[#allocation8 + $0x10] sm:$0xf]
    %v153 = vld [vmem:[#allocation8 + $0x14] sm:$0xf]
    %v154 = vld [vmem:[#allocation8 + $0x18] sm:$0xf]
    %v155 = vld [vmem:[#allocation8 + $0x1c] sm:$0xf]
    %v156 = vld [vmem:[#allocation8 + $0x20] sm:$0xf]
    %v157 = vld [vmem:[#allocation8 + $0x24] sm:$0xf]
    %v158 = vld [vmem:[#allocation8 + $0x28] sm:$0xf]
    %v159 = vld [vmem:[#allocation8 + $0x2c] sm:$0xf]
    %v160 = vld [vmem:[#allocation8 + $0x30] sm:$0xf]
    %v161 = vld [vmem:[#allocation8 + $0x34] sm:$0xf]
    %v162 = vld [vmem:[#allocation8 + $0x38] sm:$0xf]
    %v163 = vld [vmem:[#allocation8 + $0x3c] sm:$0xf]
    %v164 = vld [vmem:[%s4] sm:$0x1]
    %v166 = vlaneseq
    %v167 = vshrl.u32 %v166, 7
    %v168 = vsub.s32 0, %v167
    %v169 = vrot.slane %v164, %v168
    %v187 = vunpack.c.l.b16 %v148
    %v188 = vunpack.c.l.b16 %v149
    %v189 = vunpack.c.l.b16 %v150
    %v190 = vunpack.c.l.b16 %v151
    %v191 = vunpack.c.l.b16 %v152
    %v192 = vunpack.c.l.b16 %v153
    %v193 = vunpack.c.l.b16 %v154
    %v194 = vunpack.c.l.b16 %v155
    %v195 = vunpack.c.l.b16 %v156
    %v196 = vunpack.c.l.b16 %v157
    %v197 = vunpack.c.l.b16 %v158
    %v198 = vunpack.c.l.b16 %v159
    %v199 = vunpack.c.l.b16 %v160
    %v200 = vunpack.c.l.b16 %v161
    %v201 = vunpack.c.l.b16 %v162
    %v202 = vunpack.c.l.b16 %v163
    %v203 = vpack.c.b16 %v188, %v187
    %v204 = vpack.c.b16 %v190, %v189
    %v205 = vpack.c.b16 %v192, %v191
    %v206 = vpack.c.b16 %v194, %v193
    %v207 = vpack.c.b16 %v196, %v195
    %v208 = vpack.c.b16 %v198, %v197
    %v209 = vpack.c.b16 %v200, %v199
    %v210 = vpack.c.b16 %v202, %v201
    %219 = vmatprep.subr.bf16.mxu0 0
    %220 = vmatpush1.bf16.msra.mxu0 %v203
    %221 = vmatprep.subr.bf16.mxu0 0
    %222 = vmatpush1.bf16.msra.mxu0 %v204
    %223 = vmatprep.subr.bf16.mxu0 0
    %224 = vmatpush1.bf16.msra.mxu0 %v205
    %225 = vmatprep.subr.bf16.mxu0 0
    %226 = vmatpush1.bf16.msra.mxu0 %v206
    %227 = vmatprep.subr.bf16.mxu0 0
    %228 = vmatpush1.bf16.msra.mxu0 %v207
    %229 = vmatprep.subr.bf16.mxu0 0
    %230 = vmatpush1.bf16.msra.mxu0 %v208
    %231 = vmatprep.subr.bf16.mxu0 0
    %232 = vmatpush1.bf16.msra.mxu0 %v209
    %233 = vmatprep.subr.bf16.mxu0 0
    %234 = vmatpush1.bf16.msra.mxu0 %v210
    %235 = vmatprep.subr.bf16.mxu0 0
    %236 = vmatpush1.bf16.msra.mxu0 0
    %237 = vmatprep.subr.bf16.mxu0 0
    %238 = vmatpush1.bf16.msra.mxu0 0
    %239 = vmatprep.subr.bf16.mxu0 0
    %240 = vmatpush1.bf16.msra.mxu0 0
    %241 = vmatprep.subr.bf16.mxu0 0
    %242 = vmatpush1.bf16.msra.mxu0 0
    %243 = vmatprep.subr.bf16.mxu0 0
    %244 = vmatpush1.bf16.msra.mxu0 0
    %245 = vmatprep.subr.bf16.mxu0 0
    %246 = vmatpush1.bf16.msra.mxu0 0
    %247 = vmatprep.subr.bf16.mxu0 0
    %248 = vmatpush1.bf16.msra.mxu0 0
    %249 = vmatprep.subr.bf16.mxu0 0
    %250 = vmatpush1.bf16.msra.mxu0 0
    %251 = vmatprep.mubr.bf16.mxu0 0
    %252 = vmatmul.mubr.bf16.gmra.mrb[0].mxu0 %v147
    %v253 = vpop.f32.mrb[0].mxu0
    %v254 = vadd.f32 %v169, %v253
    %v255 = vpop.f32.mrb[0].mxu0
    %v256 = vpop.f32.mrb[0].mxu0
    %v257 = vadd.f32 %v169, %v256
    %v258 = vpop.f32.mrb[0].mxu0
    %259 = vdwg.mxu0
    %v260 = vmax.f32 %v254, 0.0
    %v261 = vmax.f32 %v257, 0.0
    %v262 = vld [vmem:[%s5] sm:$0xff]
    %263 = vmatprep.subr.mxu0 0.0
    %264 = vmatpush1.xpose.msra.mxu0 %v260
    %265 = vmatprep.subr.mxu0 0.0
    %266 = vmatpush1.xpose.msra.mxu0 %v261
    %267 = vmatprep.subr.mxu0 0.0
    %268 = vmatpush1.xpose.msra.mxu0 0.0
    %269 = vmatprep.subr.mxu0 0.0
    %270 = vmatpush1.xpose.msra.mxu0 0.0
    %271 = vmatprep.subr.mxu0 0.0
    %272 = vmatpush1.xpose.msra.mxu0 0.0
    %273 = vmatprep.subr.mxu0 0.0
    %274 = vmatpush1.xpose.msra.mxu0 0.0
    %275 = vmatprep.subr.mxu0 0.0
    %276 = vmatpush1.xpose.msra.mxu0 0.0
    %277 = vmatprep.subr.mxu0 0.0
    %278 = vmatpush1.xpose.msra.mxu0 0.0
    %279 = vmatprep.subr.mxu0 0.0
    %280 = vmatpush1.xpose.msra.mxu0 0.0
    %281 = vmatprep.subr.mxu0 0.0
    %282 = vmatpush1.xpose.msra.mxu0 0.0
    %283 = vmatprep.subr.mxu0 0.0
    %284 = vmatpush1.xpose.msra.mxu0 0.0
    %285 = vmatprep.subr.mxu0 0.0
    %286 = vmatpush1.xpose.msra.mxu0 0.0
    %287 = vmatprep.subr.mxu0 0.0
    %288 = vmatpush1.xpose.msra.mxu0 0.0
    %289 = vmatprep.subr.mxu0 0.0
    %290 = vmatpush1.xpose.msra.mxu0 0.0
    %291 = vmatprep.subr.mxu0 0.0
    %292 = vmatpush1.xpose.msra.mxu0 0.0
    %293 = vmatprep.subr.mxu0 0.0
    %294 = vmatpush1.xpose.msra.mxu0 0.0
    %295 = vmatprep.subr.mxu0 0.0
    %296 = vmatpush1.xpose.msra.mxu0 0.0
    %297 = vmatprep.subr.mxu0 0.0
    %298 = vmatpush1.xpose.msra.mxu0 0.0
    %299 = vmatprep.subr.mxu0 0.0
    %300 = vmatpush1.xpose.msra.mxu0 0.0
    %301 = vmatprep.subr.mxu0 0.0
    %302 = vmatpush1.xpose.msra.mxu0 0.0
    %303 = vmatprep.subr.mxu0 0.0
    %304 = vmatpush1.xpose.msra.mxu0 0.0
    %305 = vmatprep.subr.mxu0 0.0
    %306 = vmatpush1.xpose.msra.mxu0 0.0
    %307 = vmatprep.subr.mxu0 0.0
    %308 = vmatpush1.xpose.msra.mxu0 0.0
    %309 = vmatprep.subr.mxu0 0.0
    %310 = vmatpush1.xpose.msra.mxu0 0.0
    %311 = vmatprep.subr.mxu0 0.0
    %312 = vmatpush1.xpose.msra.mxu0 0.0
    %313 = vmatprep.subr.mxu0 0.0
    %314 = vmatpush1.xpose.msra.mxu0 0.0
    %315 = vmatprep.subr.mxu0 0.0
    %316 = vmatpush1.xpose.msra.mxu0 0.0
    %317 = vmatprep.subr.mxu0 0.0
    %318 = vmatpush1.xpose.msra.mxu0 0.0
    %319 = vmatprep.subr.mxu0 0.0
    %320 = vmatpush1.xpose.msra.mxu0 0.0
    %321 = vmatprep.subr.mxu0 0.0
    %322 = vmatpush1.xpose.msra.mxu0 0.0
    %323 = vmatprep.subr.mxu0 0.0
    %324 = vmatpush1.xpose.msra.mxu0 0.0
    %325 = vmatprep.subr.mxu0 0.0
    %326 = vmatpush1.xpose.msra.mxu0 0.0
    %327 = vmatprep.mubr.f32.mxu0 0.0
    %328 = vmatmul.mubr.f32.gmra.mrb[0].mxu0 %v262
    %v329 = vpop.f32.mrb[0].mxu0
    %v330 = vadd.f32 0.0, %v329
    %v331 = vpop.f32.mrb[0].mxu0
    %332 = vdwg.mxu0
    %s333 = sld [smem:[#allocation2]]
    %v334 = vstv %s333
    %v335 = vadd.f32 %v330, %v334
    %vm336 = vcmask 122880
    %337 = vst.msk [vmem:[#allocation9] sm:$0x1] %vm336, %v335
    // Predicated region
    $region42: #{tpu_custom_call.1} parent=1 // pred_check
      _
    $region43: #{tpu_custom_call.1} parent=1 // pred_check_branch
      %339 = sbr.rel (0) target = $region45
    $region44: #{tpu_custom_call.1} parent=1 // pred_region
      %s341 = ssub.s32 16, 16
      %342 = vsyncadd [#allocation5], %s341
      %s344 = sshll.u32 [#allocation9], 4
      %s345 = int_to_ptr.vmem [resolvable:$true] %s344
      %347 = dma.vmem_to_hbm [thread:$0]  %s345, 16, %s7, [#allocation5]
    $region45: #{tpu_custom_call.1} parent=1 // pred_fallthru
      _
    // Predicated region
    $region46: #{tpu_custom_call.1} parent=1 // pred_check
      _
    $region47: #{tpu_custom_call.1} parent=1 // pred_check_branch
      %349 = sbr.rel (0) target = $region49
    $region48: #{tpu_custom_call.1} parent=1 // pred_region
      %350 = dma.done [#allocation5], 16
    $region49: #{tpu_custom_call.1} parent=1 // pred_fallthru
      _
    %351 = vsyncpa [#allocation4], 1
    %352 = vsyncpa [#allocation7], 1
    %353 = vsyncpa [#allocation5], 1

</llo_original>
